<compile_context>
chip_gen: v6e
topology: v6e:2x2x1
jax: 0.10.0
libtpu: 0.0.40
codegen_flags: <defaults>
</compile_context>

<pallas_src>
import functools

import jax
import jax.numpy as jnp
from jax.experimental import pallas as pl
from jax.experimental.pallas import tpu as pltpu


def _patch_embed_kernel(patches_ref, w_ref, pos_ref, out_ref):
    # patches_ref: (TILE_B, TILE_N, D)      compute dtype (bf16 or f32)
    # w_ref:       (D, DIM_P)               compute dtype (W^T, lane-padded)
    # pos_ref:     (TILE_N, DIM_P)          f32 (position embeddings + bias)
    # out_ref:     (TILE_B, TILE_N, DIM_P)  output dtype (f32)
    tb, tn, d = patches_ref.shape
    # Collapse (TILE_B, TILE_N) into one big MXU M dimension (layout no-op:
    # minor dim unchanged, only leading dims merge).
    x2 = patches_ref[...].reshape(tb * tn, d)
    y = jnp.dot(x2, w_ref[...], preferred_element_type=jnp.float32)
    y = y.reshape(tb, tn, y.shape[-1]) + pos_ref[...][None, :, :]
    out_ref[...] = y.astype(out_ref.dtype)


def extract_patches(x, patch_size):
    """Exactly reproduce torch unfold(2,p,p).unfold(3,p,p).contiguous().view()."""
    B, C, H, W = x.shape
    p = patch_size
    nH, nW = H // p, W // p
    # (B,C,nH,p,nW,p) -> (B,C,nH,nW,p,p) -> (B, nH*nW, C*p*p)
    x6 = x.reshape(B, C, nH, p, nW, p).transpose(0, 1, 2, 4, 3, 5)
    return x6.reshape(B, nH * nW, C * p * p)


def _largest_tile_n(n, target):
    """Largest multiple-of-8 divisor of n that is <= target; else n (full)."""
    if n % 8 != 0:
        return n
    best = 8
    d = 8
    while d <= min(n, target):
        if n % d == 0:
            best = d
        d += 8
    return best


def _largest_tile_b(b, tile_n, target_m):
    """Largest divisor of b with tile_b * tile_n <= target_m (at least 1)."""
    best = 1
    for d in range(1, b + 1):
        if b % d == 0 and d * tile_n <= target_m:
            best = d
    return best


@functools.partial(jax.jit, static_argnames=("patch_size", "compute_dtype"))
def patch_embedding_forward(x, weight, bias, pos_emb, patch_size,
                            compute_dtype=jnp.bfloat16):
    """x: (B, C, H, W) f32.  weight: (dim, patch_dim) (PyTorch nn.Linear layout).
    bias: (dim,).  pos_emb: (1, num_patches, dim).  Returns (B, N, dim)."""
    B, C, H, W = x.shape
    dim, patch_dim = weight.shape
    p = patch_size
    N = (H // p) * (W // p)

    # Patch extraction: data movement only; fusible into the kernel input.
    patches = extract_patches(x, p).astype(compute_dtype)           # (B, N, D)

    # Lane-pad the embedding dim to a multiple of 128 for dense stores.
    dim_p = ((dim + 127) // 128) * 128
    w_t = weight.T.astype(compute_dtype)                            # (D, dim)
    pos_b = pos_emb[0].astype(jnp.float32) + bias.astype(jnp.float32)[None, :]
    if dim_p != dim:
        w_t = jnp.pad(w_t, ((0, 0), (0, dim_p - dim)))
        pos_b = jnp.pad(pos_b, ((0, 0), (0, dim_p - dim)))

    # Tile sizes: fill the MXU M dimension with TILE_B * TILE_N rows while
    # keeping per-step VMEM modest (fits v7x's 64 MiB with headroom).
    TILE_N = _largest_tile_n(N, 256)
    TILE_B = _largest_tile_b(B, TILE_N, 512)
    grid = (B // TILE_B, N // TILE_N)

    out = pl.pallas_call(
        _patch_embed_kernel,
        out_shape=jax.ShapeDtypeStruct((B, N, dim_p), x.dtype),
        grid_spec=pltpu.PrefetchScalarGridSpec(
            num_scalar_prefetch=0,
            grid=grid,
            in_specs=[
                pl.BlockSpec((TILE_B, TILE_N, patch_dim),
                             lambda bi, ni: (bi, ni, 0)),
                pl.BlockSpec((patch_dim, dim_p), lambda bi, ni: (0, 0)),
                pl.BlockSpec((TILE_N, dim_p), lambda bi, ni: (ni, 0)),
            ],
            out_specs=pl.BlockSpec((TILE_B, TILE_N, dim_p),
                                   lambda bi, ni: (bi, ni, 0)),
        ),
        compiler_params=pltpu.CompilerParams(
            dimension_semantics=("parallel", "parallel"),
            allow_input_fusion=[True, False, False],
            vmem_limit_bytes=64 * 1024 * 1024,
        ),
    )(patches, w_t, pos_b)

    if dim_p != dim:
        out = out[..., :dim]
    return out
    # TODO(synk): for very large patch_dim (e.g. p=32, C=3 -> D=3072) add a K
    # grid axis ('arbitrary', last) with an f32 VMEM accumulator.


def reference_forward(x, weight, bias, pos_emb, patch_size, compute_dtype=None):
    patches = extract_patches(x, patch_size)
    w = weight
    if compute_dtype is not None:
        patches = patches.astype(compute_dtype)
        w = w.astype(compute_dtype)
    y = jnp.einsum("bnd,kd->bnk", patches, w,
                   preferred_element_type=jnp.float32)
    y = y + bias.astype(jnp.float32)[None, None, :] + pos_emb.astype(jnp.float32)
    return y.astype(x.dtype)


if __name__ == "__main__":
    # Small shapes consistent with the module: img=16, patch=4, C=4, dim=32.
    img_size, patch_size, channels, dim = 16, 4, 4, 32
    B = 2
    num_patches = (img_size // patch_size) ** 2            # 16
    patch_dim = channels * patch_size * patch_size          # 64

    key = jax.random.PRNGKey(0)
    kx, kw, kb, kp = jax.random.split(key, 4)

    x = jax.random.normal(kx, (B, channels, img_size, img_size), dtype=jnp.float32)
    bound = 1.0 / (patch_dim ** 0.5)
    weight = jax.random.uniform(kw, (dim, patch_dim), jnp.float32, -bound, bound)
    bias = jax.random.uniform(kb, (dim,), jnp.float32, -bound, bound)
    # position_embeddings init to zeros in the module; use nonzero values here
    # so the fused add is actually exercised.
    pos_emb = 0.02 * jax.random.normal(kp, (1, num_patches, dim), dtype=jnp.float32)

    # --- f32 compute path: exact check vs the PyTorch-equivalent reference ---
    out_f32 = patch_embedding_forward(x, weight, bias, pos_emb,
                                      patch_size=patch_size,
                                      compute_dtype=jnp.float32)
    out_f32 = jax.block_until_ready(out_f32)
    ref_f32 = reference_forward(x, weight, bias, pos_emb, patch_size)
    assert out_f32.shape == (B, num_patches, dim)
    assert jnp.allclose(out_f32, ref_f32, atol=1e-5, rtol=1e-5)

    # --- default bf16 matmul path: check vs a dtype-matched reference ---
    out_bf16 = patch_embedding_forward(x, weight, bias, pos_emb,
                                       patch_size=patch_size)
    out_bf16 = jax.block_until_ready(out_bf16)
    ref_bf16 = reference_forward(x, weight, bias, pos_emb, patch_size,
                                 compute_dtype=jnp.bfloat16)
    assert out_bf16.shape == (B, num_patches, dim)
    assert jnp.allclose(out_bf16, ref_bf16, atol=2e-3, rtol=2e-3)
    # Sanity vs the exact f32 reference with bf16-appropriate tolerance.
    assert jnp.allclose(out_bf16, ref_f32, atol=5e-2, rtol=5e-2)

    print("KERNEL_OK")
</pallas_src>

<mosaic_0001>
module attributes {stable_mosaic.version = 11 : i64} {
  func.func @_patch_embed_kernel(%arg0: i32, %arg1: i32, %arg2: memref<2x16x64xf32, #tpu.memory_space<vmem>>, %arg3: memref<64x128xf32, #tpu.memory_space<vmem>>, %arg4: memref<16x128xf32, #tpu.memory_space<vmem>>, %arg5: memref<2x16x128xf32, #tpu.memory_space<vmem>>) attributes {dimension_semantics = [#tpu.dimension_semantics<parallel>, #tpu.dimension_semantics<parallel>], iteration_bounds = array<i64: 1, 1>, scalar_prefetch = 0 : i64, scratch_operands = 0 : i64, tpu.core_type = #tpu.core_type<tc>, window_params = [{transform_indices = @transform_0, window_bounds = array<i64: 2, 16, 64>}, {pipeline_mode = #tpu.pipeline_mode<synchronous>, transform_indices = @transform_1, window_bounds = array<i64: 64, 128>}, {transform_indices = @transform_2, window_bounds = array<i64: 16, 128>}, {transform_indices = @transform_3, window_bounds = array<i64: 2, 16, 128>}]} {
    %c0 = arith.constant 0 : index
    %c0_0 = arith.constant 0 : index
    %c0_1 = arith.constant 0 : index
    %0 = vector.load %arg2[%c0, %c0_0, %c0_1] : memref<2x16x64xf32, #tpu.memory_space<vmem>>, vector<2x16x64xf32>
    %1 = vector.shape_cast %0 : vector<2x16x64xf32> to vector<32x64xf32>
    %c0_2 = arith.constant 0 : index
    %c0_3 = arith.constant 0 : index
    %2 = vector.load %arg3[%c0_2, %c0_3] : memref<64x128xf32, #tpu.memory_space<vmem>>, vector<64x128xf32>
    %cst = arith.constant dense<0.000000e+00> : vector<32x128xf32>
    %3 = tpu.matmul %1, %2, %cst {dimension_numbers = #tpu.dot_dimension_numbers<[1], [0], [0], [1], [0, 0, 1, 1], [], []>} : vector<32x64xf32>, vector<64x128xf32>, vector<32x128xf32> -> vector<32x128xf32>
    %4 = vector.shape_cast %3 : vector<32x128xf32> to vector<2x16x128xf32>
    %c0_4 = arith.constant 0 : index
    %c0_5 = arith.constant 0 : index
    %5 = vector.load %arg4[%c0_4, %c0_5] : memref<16x128xf32, #tpu.memory_space<vmem>>, vector<16x128xf32>
    %6 = vector.shape_cast %5 : vector<16x128xf32> to vector<1x16x128xf32>
    %7 = vector.broadcast %6 : vector<1x16x128xf32> to vector<2x16x128xf32>
    %8 = arith.addf %4, %7 : vector<2x16x128xf32>
    %c0_6 = arith.constant 0 : index
    %c0_7 = arith.constant 0 : index
    %c0_8 = arith.constant 0 : index
    %9 = vector.load %arg5[%c0_6, %c0_7, %c0_8] : memref<2x16x128xf32, #tpu.memory_space<vmem>>, vector<2x16x128xf32>
    tpu.vector_store %arg5[%c0_6, %c0_7, %c0_8], %8 {strides = array<i32>} : memref<2x16x128xf32, #tpu.memory_space<vmem>>, vector<2x16x128xf32>,
    return
  }
  func.func @transform_0(%arg0: i32, %arg1: i32) -> (i32, i32, i32) {
    %c0_i32 = arith.constant 0 : i32
    %c0_i32_0 = arith.constant 0 : i32
    return %arg0, %arg1, %c0_i32 : i32, i32, i32
  }
  func.func @transform_1(%arg0: i32, %arg1: i32) -> (i32, i32) {
    %c0_i32 = arith.constant 0 : i32
    %c0_i32_0 = arith.constant 0 : i32
    %c0_i32_1 = arith.constant 0 : i32
    return %c0_i32, %c0_i32_0 : i32, i32
  }
  func.func @transform_2(%arg0: i32, %arg1: i32) -> (i32, i32) {
    %c0_i32 = arith.constant 0 : i32
    %c0_i32_0 = arith.constant 0 : i32
    return %arg1, %c0_i32 : i32, i32
  }
  func.func @transform_3(%arg0: i32, %arg1: i32) -> (i32, i32, i32) {
    %c0_i32 = arith.constant 0 : i32
    %c0_i32_0 = arith.constant 0 : i32
    return %arg0, %arg1, %c0_i32 : i32, i32, i32
  }
}

</mosaic_0001>

<llo_original>
// kernel: patch_embedding_forward.1
$region0: #{patch_embedding_forward.1}
  #allocation0 [shape = 'u32[]', space=smem, size = 0x4, offset = 0x4, fixed_abs, tag = 'smem constant byte address 0x4 - core index']
  #allocation1 [shape = 'u32[144,128]{1,0:T(1,128)}', space=vmem, size = 0x12000, scoped, tag = 'internal scratch']
  %s0 = inlined_call_operand.vmem [shape: f32[2,16,64], index: 0, kind: input, shape index: {}]
  %s1 = inlined_call_operand.vmem [shape: f32[64,128], index: 1, kind: input, shape index: {}]
  %s2 = inlined_call_operand.vmem [shape: f32[16,128], index: 2, kind: input, shape index: {}]
  %s3 = inlined_call_operand.hbm [shape: f32[2,16,128], index: 3, kind: output, shape index: {}]
  %s4 = sld [smem:[#allocation0]]
  $region22: #{patch_embedding_forward.1} parent=0
    _
  %s6 = ssub.s32 1, %s4
  %s7 = scalar_select 0, %s6, %s4
  $region1: #{patch_embedding_forward.1} parent=0
    #allocation2 [shape = 'u8[16384]{0}', space=vmem, size = 0x4000, scoped, tag = 'output window, operand 0, single buffered']
    #allocation3 [shape = 's32[1]{0}', space=sflag, size = 0x4, scoped, tag = 'scoped memory for patch_embedding_forward.1']
    %8 = vsyncpa [#allocation3], 0
    // Predicated region
    $region2: #{patch_embedding_forward.1} parent=1 // pred_check
      _
    $region3: #{patch_embedding_forward.1} parent=1 // pred_check_branch
      %10 = sbr.rel (0) target = $region5
    $region4: #{patch_embedding_forward.1} parent=1 // pred_region
      _
    $region5: #{patch_embedding_forward.1} parent=1 // pred_fallthru
      _
    // Predicated region
    $region6: #{patch_embedding_forward.1} parent=1 // pred_check
      _
    $region7: #{patch_embedding_forward.1} parent=1 // pred_check_branch
      %12 = sbr.rel (0) target = $region9
    $region8: #{patch_embedding_forward.1} parent=1 // pred_region
      _
    $region9: #{patch_embedding_forward.1} parent=1 // pred_fallthru
      _
    // Predicated region
    $region10: #{patch_embedding_forward.1} parent=1 // pred_check
      _
    $region11: #{patch_embedding_forward.1} parent=1 // pred_check_branch
      %14 = sbr.rel (0) target = $region13
    $region12: #{patch_embedding_forward.1} parent=1 // pred_region
      _
    $region13: #{patch_embedding_forward.1} parent=1 // pred_fallthru
      _
    %v15 = vld [vmem:[%s0] sm:$0xff]
    %v16 = vld [vmem:[%s0 + $0x8] sm:$0xff]
    %v17 = vld [vmem:[%s0 + $0x10] sm:$0xff]
    %v18 = vld [vmem:[%s0 + $0x18] sm:$0xff]
    %v19 = vld [vmem:[%s1] sm:$0xff]
    %v20 = vld [vmem:[%s1 + $0x8] sm:$0xff]
    %v21 = vld [vmem:[%s1 + $0x10] sm:$0xff]
    %v22 = vld [vmem:[%s1 + $0x18] sm:$0xff]
    %v23 = vld [vmem:[%s1 + $0x20] sm:$0xff]
    %v24 = vld [vmem:[%s1 + $0x28] sm:$0xff]
    %v25 = vld [vmem:[%s1 + $0x30] sm:$0xff]
    %v26 = vld [vmem:[%s1 + $0x38] sm:$0xff]
    %vm27 = vcmask 523264
    %v29 = vsel %vm27, %v15, 0
    %v32 = vsel %vm27, %v16, 0
    %v35 = vsel %vm27, %v17, 0
    %v38 = vsel %vm27, %v18, 0
    %40 = vmatprep.subr.mxu0 0.0
    %41 = vmatpush1.msra.mxu0 0.0
    %42 = vmatprep.subr.mxu0 0.0
    %43 = vmatpush1.msra.mxu0 0.0
    %44 = vmatprep.subr.mxu0 0.0
    %45 = vmatpush1.msra.mxu0 0.0
    %46 = vmatprep.subr.mxu0 0.0
    %47 = vmatpush1.msra.mxu0 0.0
    %48 = vmatprep.subr.mxu0 0.0
    %49 = vmatpush1.msra.mxu0 0.0
    %50 = vmatprep.subr.mxu0 0.0
    %51 = vmatpush1.msra.mxu0 0.0
    %52 = vmatprep.subr.mxu0 0.0
    %53 = vmatpush1.msra.mxu0 0.0
    %54 = vmatprep.subr.mxu0 0.0
    %55 = vmatpush1.msra.mxu0 0.0
    %56 = vmatprep.subr.mxu0 0.0
    %57 = vmatpush1.msra.mxu0 %v26
    %58 = vmatprep.subr.mxu0 0.0
    %59 = vmatpush1.msra.mxu0 %v25
    %60 = vmatprep.subr.mxu0 0.0
    %61 = vmatpush1.msra.mxu0 %v24
    %62 = vmatprep.subr.mxu0 0.0
    %63 = vmatpush1.msra.mxu0 %v23
    %64 = vmatprep.subr.mxu0 0.0
    %65 = vmatpush1.msra.mxu0 %v22
    %66 = vmatprep.subr.mxu0 0.0
    %67 = vmatpush1.msra.mxu0 %v21
    %68 = vmatprep.subr.mxu0 0.0
    %69 = vmatpush1.msra.mxu0 %v20
    %70 = vmatprep.subr.mxu0 0.0
    %71 = vmatpush1.msra.mxu0 %v19
    %72 = vmatprep.subr.mxu0 0.0
    %73 = vmatpush2.msra.mxu0 0.0
    %74 = vmatprep.subr.mxu0 0.0
    %75 = vmatpush2.msra.mxu0 0.0
    %76 = vmatprep.subr.mxu0 0.0
    %77 = vmatpush2.msra.mxu0 0.0
    %78 = vmatprep.subr.mxu0 0.0
    %79 = vmatpush2.msra.mxu0 0.0
    %80 = vmatprep.subr.mxu0 0.0
    %81 = vmatpush2.msra.mxu0 0.0
    %82 = vmatprep.subr.mxu0 0.0
    %83 = vmatpush2.msra.mxu0 0.0
    %84 = vmatprep.subr.mxu0 0.0
    %85 = vmatpush2.msra.mxu0 0.0
    %86 = vmatprep.subr.mxu0 0.0
    %87 = vmatpush2.msra.mxu0 0.0
    %88 = vmatprep.subr.mxu0 0.0
    %89 = vmatpush2.msra.mxu0 0.0
    %90 = vmatprep.subr.mxu0 0.0
    %91 = vmatpush2.msra.mxu0 0.0
    %92 = vmatprep.subr.mxu0 0.0
    %93 = vmatpush2.msra.mxu0 0.0
    %94 = vmatprep.subr.mxu0 0.0
    %95 = vmatpush2.msra.mxu0 0.0
    %96 = vmatprep.subr.mxu0 0.0
    %97 = vmatpush2.msra.mxu0 0.0
    %98 = vmatprep.subr.mxu0 0.0
    %99 = vmatpush2.msra.mxu0 0.0
    %100 = vmatprep.subr.mxu0 0.0
    %101 = vmatpush2.msra.mxu0 0.0
    %102 = vmatprep.subr.mxu0 0.0
    %103 = vmatpush2.msra.mxu0 0.0
    %104 = vmatprep.mubr.f32.mxu0 0.0
    %105 = vmatmul.mubr.f32.gmra.mxu0 %v29
    %v106 = vpop.f32.mrf.mxu0
    %v107 = vadd.f32 0.0, %v106
    %v108 = vpop.f32.mrf.mxu0
    %109 = vmatprep.mubr.f32.mxu0 0.0
    %110 = vmatmul.mubr.f32.gmra.mxu0 %v32
    %v111 = vpop.f32.mrf.mxu0
    %v112 = vadd.f32 0.0, %v111
    %v113 = vpop.f32.mrf.mxu0
    %114 = vmatprep.mubr.f32.mxu0 0.0
    %115 = vmatmul.mubr.f32.gmra.mxu0 %v35
    %v116 = vpop.f32.mrf.mxu0
    %v117 = vadd.f32 0.0, %v116
    %v118 = vpop.f32.mrf.mxu0
    %119 = vmatprep.mubr.f32.mxu0 0.0
    %120 = vmatmul.mubr.f32.gmra.mxu0 %v38
    %v121 = vpop.f32.mrf.mxu0
    %v122 = vadd.f32 0.0, %v121
    %v123 = vpop.f32.mrf.mxu0
    %124 = vdwg.mxu0
    %v125 = vld [vmem:[%s2] sm:$0xff]
    %v126 = vld [vmem:[%s2 + $0x8] sm:$0xff]
    %v127 = vadd.f32 %v107, %v125
    %v128 = vadd.f32 %v112, %v126
    %v129 = vadd.f32 %v117, %v125
    %v130 = vadd.f32 %v122, %v126
    %131 = vst [vmem:[#allocation2] sm:$0xff] %v127
    %132 = vst [vmem:[#allocation2 + $0x8] sm:$0xff] %v128
    %133 = vst [vmem:[#allocation2 + $0x10] sm:$0xff] %v129
    %134 = vst [vmem:[#allocation2 + $0x18] sm:$0xff] %v130
    // Predicated region
    $region14: #{patch_embedding_forward.1} parent=1 // pred_check
      _
    $region15: #{patch_embedding_forward.1} parent=1 // pred_check_branch
      %136 = sbr.rel (0) target = $region17
    $region16: #{patch_embedding_forward.1} parent=1 // pred_region
      %s138 = ssub.s32 512, 512
      %139 = vsyncadd [#allocation3], %s138
      %s140 = sshll.u32 [#allocation2], 4
      %s141 = int_to_ptr.vmem [resolvable:$true] %s140
      %146 = dma.vmem_to_hbm [thread:$0]  %s141, 512, %s3, [#allocation3], 128, 128, 8
    $region17: #{patch_embedding_forward.1} parent=1 // pred_fallthru
      _
    // Predicated region
    $region18: #{patch_embedding_forward.1} parent=1 // pred_check
      _
    $region19: #{patch_embedding_forward.1} parent=1 // pred_check_branch
      %148 = sbr.rel (0) target = $region21
    $region20: #{patch_embedding_forward.1} parent=1 // pred_region
      %149 = dma.done [#allocation3], 512
    $region21: #{patch_embedding_forward.1} parent=1 // pred_fallthru
      _
    %150 = vsyncpa [#allocation3], 1

</llo_original>
